<compile_context>
chip_gen: v7x
topology: tpu7x:2x2x1
jax: 0.10.0
libtpu: 0.0.40
codegen_flags: <defaults>
</compile_context>

<pallas_src>
import jax
import jax.numpy as jnp
from jax import lax
from jax.experimental import pallas as pl
from jax.experimental.pallas import tpu as pltpu

EMBED_DIM = 256
PATCH_SIZE = 16
OUT_CHANNELS = 1
OUT_DIM = PATCH_SIZE * OUT_CHANNELS
LN_EPS = 1e-5            # torch nn.LayerNorm default
MAX_ROW_TILE = 256


def _round_up(v, m):
    return (v + m - 1) // m * m


def output_layer_kernel(x_ref, cscale_ref, cshift_ref, w_ref, b_ref, o_ref):
    """One row-tile: fused LayerNorm + adaLN scaleshift + output projection."""
    x = x_ref[...]                                          # (TM, C) f32
    # single-pass LayerNorm statistics
    mu = jnp.mean(x, axis=-1, keepdims=True)
    ms = jnp.mean(x * x, axis=-1, keepdims=True)
    inv = lax.rsqrt(ms - mu * mu + LN_EPS)
    # combined affine: ln_w*(1+scale) and ln_b*(1+scale)+shift precomputed in wrapper
    y = (x - mu) * inv * cscale_ref[...] + cshift_ref[...]  # (TM, C) f32
    # output projection on the MXU in bf16, f32 accumulation
    out = jnp.dot(y.astype(jnp.bfloat16), w_ref[...],
                  preferred_element_type=jnp.float32) + b_ref[...]
    o_ref[...] = out


def output_layer(x, c, params):
    """x: (B, T, C) f32, c: (1, Tc, C) f32 -> (B, T, patch_size*out_channels)."""
    mod_w, mod_b, ln_w, ln_b, out_w, out_b = params
    B, T, C = x.shape
    assert C == EMBED_DIM
    assert c.shape[0] == 1, "torch .view(1, 2, C) requires conditioning batch == 1"
    P = out_w.shape[1]

    # ---- hoisted adaLN modulation (grid-invariant): SiLU -> Linear -> chunk ----
    c_last = c[0, -1, :]                               # (C,)
    silu = c_last * jax.nn.sigmoid(c_last)
    mod = silu @ mod_w + mod_b.reshape(-1)             # (2C,)
    shift = mod[:C]                                    # chunk 0 (dim=1) = shift
    scale = mod[C:]                                    # chunk 1 (dim=1) = scale
    # fold LayerNorm affine into the adaLN scale/shift:
    #   (xn*ln_w + ln_b)*(1+scale) + shift == xn*cs + csh
    comb_scale = (ln_w.reshape(-1) * (1.0 + scale)).reshape(1, C).astype(jnp.float32)
    comb_shift = (ln_b.reshape(-1) * (1.0 + scale) + shift).reshape(1, C).astype(jnp.float32)

    # ---- flatten (B, T) into one tiled row axis ----
    M = B * T
    x2 = x.reshape(M, C)
    tile_m = min(_round_up(M, 8), MAX_ROW_TILE)
    padded_M = _round_up(M, tile_m)
    if padded_M != M:
        x2 = jnp.pad(x2, ((0, padded_M - M), (0, 0)))
    grid = (padded_M // tile_m,)

    w_bf16 = out_w.astype(jnp.bfloat16)                # cast once, outside the kernel

    out2 = pl.pallas_call(
        output_layer_kernel,
        out_shape=jax.ShapeDtypeStruct((padded_M, P), jnp.float32),
        grid_spec=pltpu.PrefetchScalarGridSpec(
            num_scalar_prefetch=0,
            grid=grid,
            in_specs=[
                pl.BlockSpec((tile_m, C), lambda i: (i, 0)),   # x rows
                pl.BlockSpec((1, C), lambda i: (0, 0)),        # combined scale
                pl.BlockSpec((1, C), lambda i: (0, 0)),        # combined shift
                pl.BlockSpec((C, P), lambda i: (0, 0)),        # out weight (transposed)
                pl.BlockSpec((1, P), lambda i: (0, 0)),        # out bias
            ],
            out_specs=pl.BlockSpec((tile_m, P), lambda i: (i, 0)),
        ),
        compiler_params=pltpu.CompilerParams(
            dimension_semantics=("parallel",),
            vmem_limit_bytes=64 * 1024 * 1024,
        ),
    )(x2, comb_scale, comb_shift, w_bf16, out_b)

    return out2[:M].reshape(B, T, P)


def init_params(key):
    C, P = EMBED_DIM, OUT_DIM
    ks = jax.random.split(key, 4)
    s = 0.02
    mod_w = jax.random.normal(ks[0], (C, 2 * C), jnp.float32) * s   # (in, out) layout
    mod_b = jax.random.normal(ks[1], (2 * C,), jnp.float32) * s
    ln_w = jnp.ones((C,), jnp.float32)
    ln_b = jnp.zeros((C,), jnp.float32)
    out_w = jax.random.normal(ks[2], (C, P), jnp.float32) * s       # (in, out) layout
    out_b = jax.random.normal(ks[3], (1, P), jnp.float32) * s
    return (mod_w, mod_b, ln_w, ln_b, out_w, out_b)


def reference(x, c, params):
    """Pure-JAX f32 mirror of the PyTorch OutputLayer1D forward."""
    mod_w, mod_b, ln_w, ln_b, out_w, out_b = params
    B, T, C = x.shape
    silu = c * jax.nn.sigmoid(c)
    mod = silu @ mod_w + mod_b.reshape(-1)             # (1, Tc, 2C)
    mod = mod[:, -1, :].reshape(1, 2, C)
    shift = mod[:, 0, :]                               # (1, C)
    scale = mod[:, 1, :]                               # (1, C)
    mu = x.mean(-1, keepdims=True)
    var = ((x - mu) ** 2).mean(-1, keepdims=True)
    xn = (x - mu) / jnp.sqrt(var + LN_EPS) * ln_w.reshape(-1) + ln_b.reshape(-1)
    y = xn * (1.0 + scale) + shift
    return y @ out_w + out_b.reshape(-1)


if __name__ == "__main__":
    key = jax.random.PRNGKey(0)
    kx, kc, kp = jax.random.split(key, 3)
    B, T, Tc = 2, 8, 4
    x = jax.random.normal(kx, (B, T, EMBED_DIM), jnp.float32)
    c = jax.random.normal(kc, (1, Tc, EMBED_DIM), jnp.float32)   # cond batch == 1
    params = init_params(kp)

    out = output_layer(x, c, params)
    out = jax.block_until_ready(out)

    ref = reference(x, c, params)
    assert out.shape == (B, T, OUT_DIM)
    err = float(jnp.max(jnp.abs(out - ref)))
    # bf16 MXU operands (f32 accumulation) => loosened tolerance vs f32 reference
    assert jnp.allclose(out, ref, atol=3e-2, rtol=3e-2), f"max abs err {err}"
    print("KERNEL_OK")
</pallas_src>

<mosaic_0001>
module attributes {stable_mosaic.version = 11 : i64} {
  func.func @output_layer_kernel(%arg0: i32, %arg1: memref<16x256xf32, #tpu.memory_space<vmem>>, %arg2: memref<1x256xf32, #tpu.memory_space<vmem>>, %arg3: memref<1x256xf32, #tpu.memory_space<vmem>>, %arg4: memref<256x16xbf16, #tpu.memory_space<vmem>>, %arg5: memref<1x16xf32, #tpu.memory_space<vmem>>, %arg6: memref<16x16xf32, #tpu.memory_space<vmem>>) attributes {dimension_semantics = [#tpu.dimension_semantics<parallel>], iteration_bounds = array<i64: 1>, scalar_prefetch = 0 : i64, scratch_operands = 0 : i64, tpu.core_type = #tpu.core_type<tc>, window_params = [{transform_indices = @transform_0, window_bounds = array<i64: 16, 256>}, {pipeline_mode = #tpu.pipeline_mode<synchronous>, transform_indices = @transform_1, window_bounds = array<i64: 1, 256>}, {pipeline_mode = #tpu.pipeline_mode<synchronous>, transform_indices = @transform_2, window_bounds = array<i64: 1, 256>}, {pipeline_mode = #tpu.pipeline_mode<synchronous>, transform_indices = @transform_3, window_bounds = array<i64: 256, 16>}, {pipeline_mode = #tpu.pipeline_mode<synchronous>, transform_indices = @transform_4, window_bounds = array<i64: 1, 16>}, {transform_indices = @transform_5, window_bounds = array<i64: 16, 16>}]} {
    %c0 = arith.constant 0 : index
    %c0_0 = arith.constant 0 : index
    %0 = vector.load %arg1[%c0, %c0_0] : memref<16x256xf32, #tpu.memory_space<vmem>>, vector<16x256xf32>
    %cst = arith.constant dense<0.000000e+00> : vector<16xf32>
    %1 = vector.multi_reduction <add>, %0, %cst [1] : vector<16x256xf32> to vector<16xf32>
    %2 = vector.shape_cast %1 : vector<16xf32> to vector<16x1xf32>
    %cst_1 = arith.constant 2.560000e+02 : f32
    %3 = vector.broadcast %cst_1 : f32 to vector<16x1xf32>
    %4 = arith.divf %2, %3 : vector<16x1xf32>
    %5 = arith.mulf %0, %0 : vector<16x256xf32>
    %cst_2 = arith.constant dense<0.000000e+00> : vector<16xf32>
    %6 = vector.multi_reduction <add>, %5, %cst_2 [1] : vector<16x256xf32> to vector<16xf32>
    %7 = vector.shape_cast %6 : vector<16xf32> to vector<16x1xf32>
    %cst_3 = arith.constant 2.560000e+02 : f32
    %8 = vector.broadcast %cst_3 : f32 to vector<16x1xf32>
    %9 = arith.divf %7, %8 : vector<16x1xf32>
    %10 = arith.mulf %4, %4 : vector<16x1xf32>
    %11 = arith.subf %9, %10 : vector<16x1xf32>
    %cst_4 = arith.constant 9.99999974E-6 : f32
    %12 = vector.broadcast %cst_4 : f32 to vector<16x1xf32>
    %13 = arith.addf %11, %12 : vector<16x1xf32>
    %14 = math.rsqrt %13 : vector<16x1xf32>
    %15 = vector.broadcast %4 : vector<16x1xf32> to vector<16x256xf32>
    %16 = arith.subf %0, %15 : vector<16x256xf32>
    %17 = vector.broadcast %14 : vector<16x1xf32> to vector<16x256xf32>
    %18 = arith.mulf %16, %17 : vector<16x256xf32>
    %c0_5 = arith.constant 0 : index
    %c0_6 = arith.constant 0 : index
    %19 = vector.load %arg2[%c0_5, %c0_6] : memref<1x256xf32, #tpu.memory_space<vmem>>, vector<1x256xf32>
    %20 = vector.broadcast %19 : vector<1x256xf32> to vector<16x256xf32>
    %21 = arith.mulf %18, %20 : vector<16x256xf32>
    %c0_7 = arith.constant 0 : index
    %c0_8 = arith.constant 0 : index
    %22 = vector.load %arg3[%c0_7, %c0_8] : memref<1x256xf32, #tpu.memory_space<vmem>>, vector<1x256xf32>
    %23 = vector.broadcast %22 : vector<1x256xf32> to vector<16x256xf32>
    %24 = arith.addf %21, %23 : vector<16x256xf32>
    %25 = arith.truncf %24 : vector<16x256xf32> to vector<16x256xbf16>
    %c0_9 = arith.constant 0 : index
    %c0_10 = arith.constant 0 : index
    %26 = vector.load %arg4[%c0_9, %c0_10] : memref<256x16xbf16, #tpu.memory_space<vmem>>, vector<256x16xbf16>
    %cst_11 = arith.constant dense<0.000000e+00> : vector<16x16xf32>
    %27 = tpu.matmul %25, %26, %cst_11 {dimension_numbers = #tpu.dot_dimension_numbers<[1], [0], [0], [1], [0, 0, 1, 1], [], []>} : vector<16x256xbf16>, vector<256x16xbf16>, vector<16x16xf32> -> vector<16x16xf32>
    %c0_12 = arith.constant 0 : index
    %c0_13 = arith.constant 0 : index
    %28 = vector.load %arg5[%c0_12, %c0_13] : memref<1x16xf32, #tpu.memory_space<vmem>>, vector<1x16xf32>
    %29 = vector.broadcast %28 : vector<1x16xf32> to vector<16x16xf32>
    %30 = arith.addf %27, %29 : vector<16x16xf32>
    %c0_14 = arith.constant 0 : index
    %c0_15 = arith.constant 0 : index
    %31 = vector.load %arg6[%c0_14, %c0_15] : memref<16x16xf32, #tpu.memory_space<vmem>>, vector<16x16xf32>
    tpu.vector_store %arg6[%c0_14, %c0_15], %30 {strides = array<i32>} : memref<16x16xf32, #tpu.memory_space<vmem>>, vector<16x16xf32>,
    return
  }
  func.func @transform_0(%arg0: i32) -> (i32, i32) {
    %c0_i32 = arith.constant 0 : i32
    %c0_i32_0 = arith.constant 0 : i32
    return %arg0, %c0_i32 : i32, i32
  }
  func.func @transform_1(%arg0: i32) -> (i32, i32) {
    %c0_i32 = arith.constant 0 : i32
    %c0_i32_0 = arith.constant 0 : i32
    %c0_i32_1 = arith.constant 0 : i32
    return %c0_i32, %c0_i32_0 : i32, i32
  }
  func.func @transform_2(%arg0: i32) -> (i32, i32) {
    %c0_i32 = arith.constant 0 : i32
    %c0_i32_0 = arith.constant 0 : i32
    %c0_i32_1 = arith.constant 0 : i32
    return %c0_i32, %c0_i32_0 : i32, i32
  }
  func.func @transform_3(%arg0: i32) -> (i32, i32) {
    %c0_i32 = arith.constant 0 : i32
    %c0_i32_0 = arith.constant 0 : i32
    %c0_i32_1 = arith.constant 0 : i32
    return %c0_i32, %c0_i32_0 : i32, i32
  }
  func.func @transform_4(%arg0: i32) -> (i32, i32) {
    %c0_i32 = arith.constant 0 : i32
    %c0_i32_0 = arith.constant 0 : i32
    %c0_i32_1 = arith.constant 0 : i32
    return %c0_i32, %c0_i32_0 : i32, i32
  }
  func.func @transform_5(%arg0: i32) -> (i32, i32) {
    %c0_i32 = arith.constant 0 : i32
    %c0_i32_0 = arith.constant 0 : i32
    return %arg0, %c0_i32 : i32, i32
  }
}

</mosaic_0001>

<llo_original>
// kernel: tpu_custom_call.1
$region0: #{tpu_custom_call.1}
  #allocation0 [shape = 'u32[]', space=smem, size = 0x4, offset = 0x4, fixed_abs, tag = 'smem constant byte address 0x4 - core index']
  #allocation1 [shape = 'u32[144,128]{1,0:T(1,128)}', space=vmem, size = 0x12000, scoped, tag = 'internal scratch']
  %s0 = inlined_call_operand.hbm [shape: f32[16,256], index: 0, kind: input, shape index: {}]
  %s1 = inlined_call_operand.hbm [shape: f32[1,256], index: 1, kind: input, shape index: {}]
  %s2 = inlined_call_operand.hbm [shape: f32[1,256], index: 2, kind: input, shape index: {}]
  %s3 = inlined_call_operand.hbm [shape: bf16[256,16], index: 3, kind: input, shape index: {}]
  %s4 = inlined_call_operand.hbm [shape: f32[1,16], index: 4, kind: input, shape index: {}]
  %s5 = inlined_call_operand.hbm [shape: f32[16,16], index: 5, kind: output, shape index: {}]
  %s6 = sld [smem:[#allocation0]]
  $region50: #{tpu_custom_call.1} parent=0
    _
  %s8 = ssub.s32 1, %s6
  %s9 = scalar_select 0, %s8, %s6
  $region1: #{tpu_custom_call.1} parent=0
    #allocation2 [shape = 'u8[16384]{0}', space=vmem, size = 0x4000, scoped, tag = 'input window, operand 0, single buffered']
    #allocation3 [shape = 's32[1]{0}', space=sflag, size = 0x4, scoped, tag = 'scoped memory for tpu_custom_call.1']
    #allocation4 [shape = 's32[1]{0}', space=sflag, size = 0x4, scoped, tag = 'scoped memory for tpu_custom_call.1']
    #allocation5 [shape = 'u8[1024]{0}', space=vmem, size = 0x400, scoped, tag = 'input window, operand 1, single buffered']
    #allocation6 [shape = 's32[1]{0}', space=sflag, size = 0x4, scoped, tag = 'scoped memory for tpu_custom_call.1']
    #allocation7 [shape = 'u8[1024]{0}', space=vmem, size = 0x400, scoped, tag = 'input window, operand 2, single buffered']
    #allocation8 [shape = 'u8[65536]{0}', space=vmem, size = 0x10000, scoped, tag = 'input window, operand 3, single buffered']
    #allocation9 [shape = 's32[1]{0}', space=sflag, size = 0x4, scoped, tag = 'scoped memory for tpu_custom_call.1']
    #allocation10 [shape = 'u8[512]{0}', space=vmem, size = 0x400, scoped, tag = 'input window, operand 4, single buffered']
    #allocation11 [shape = 'u8[8192]{0}', space=vmem, size = 0x2000, scoped, tag = 'output window, operand 0, single buffered']
    %10 = vsyncpa [#allocation3], 0
    %11 = vsyncpa [#allocation6], 0
    %12 = vsyncpa [#allocation9], 0
    %13 = vsyncpa [#allocation4], 0
    // Predicated region
    $region2: #{tpu_custom_call.1} parent=1 // pred_check
      _
    $region3: #{tpu_custom_call.1} parent=1 // pred_check_branch
      %15 = sbr.rel (0) target = $region5
    $region4: #{tpu_custom_call.1} parent=1 // pred_region
      %s17 = ssub.s32 512, 512
      %18 = vsyncadd [#allocation3], %s17
      %s19 = sshll.u32 [#allocation2], 4
      %s20 = int_to_ptr.vmem [resolvable:$true] %s19
      %25 = dma.hbm_to_vmem [thread:$0]  %s0, 512, %s20, [#allocation3], 256, 256, 16
    $region5: #{tpu_custom_call.1} parent=1 // pred_fallthru
      _
    // Predicated region
    $region6: #{tpu_custom_call.1} parent=1 // pred_check
      _
    $region7: #{tpu_custom_call.1} parent=1 // pred_check_branch
      %27 = sbr.rel (0) target = $region9
    $region8: #{tpu_custom_call.1} parent=1 // pred_region
      %s29 = ssub.s32 32, 32
      %30 = vsyncadd [#allocation6], %s29
      %s32 = sshll.u32 [#allocation5], 4
      %s33 = int_to_ptr.vmem [resolvable:$true] %s32
      %35 = dma.hbm_to_vmem [thread:$0]  %s1, 32, %s33, [#allocation6]
    $region9: #{tpu_custom_call.1} parent=1 // pred_fallthru
      _
    // Predicated region
    $region10: #{tpu_custom_call.1} parent=1 // pred_check
      _
    $region11: #{tpu_custom_call.1} parent=1 // pred_check_branch
      %37 = sbr.rel (0) target = $region13
    $region12: #{tpu_custom_call.1} parent=1 // pred_region
      %s39 = ssub.s32 32, 32
      %40 = vsyncadd [#allocation6], %s39
      %s42 = sshll.u32 [#allocation7], 4
      %s43 = int_to_ptr.vmem [resolvable:$true] %s42
      %45 = dma.hbm_to_vmem [thread:$0]  %s2, 32, %s43, [#allocation6]
    $region13: #{tpu_custom_call.1} parent=1 // pred_fallthru
      _
    // Predicated region
    $region14: #{tpu_custom_call.1} parent=1 // pred_check
      _
    $region15: #{tpu_custom_call.1} parent=1 // pred_check_branch
      %47 = sbr.rel (0) target = $region17
    $region16: #{tpu_custom_call.1} parent=1 // pred_region
      %s49 = ssub.s32 2048, 2048
      %50 = vsyncadd [#allocation9], %s49
      %s51 = sshll.u32 [#allocation8], 4
      %s52 = int_to_ptr.vmem [resolvable:$true] %s51
      %57 = dma.hbm_to_vmem [thread:$0]  %s3, 2048, %s52, [#allocation9], 64, 64, 4
    $region17: #{tpu_custom_call.1} parent=1 // pred_fallthru
      _
    // Predicated region
    $region18: #{tpu_custom_call.1} parent=1 // pred_check
      _
    $region19: #{tpu_custom_call.1} parent=1 // pred_check_branch
      %59 = sbr.rel (0) target = $region21
    $region20: #{tpu_custom_call.1} parent=1 // pred_region
      %s61 = ssub.s32 16, 16
      %62 = vsyncadd [#allocation9], %s61
      %s64 = sshll.u32 [#allocation10], 4
      %s65 = int_to_ptr.vmem [resolvable:$true] %s64
      %67 = dma.hbm_to_vmem [thread:$0]  %s4, 16, %s65, [#allocation9]
    $region21: #{tpu_custom_call.1} parent=1 // pred_fallthru
      _
    // Predicated region
    $region22: #{tpu_custom_call.1} parent=1 // pred_check
      _
    $region23: #{tpu_custom_call.1} parent=1 // pred_check_branch
      %69 = sbr.rel (0) target = $region25
    $region24: #{tpu_custom_call.1} parent=1 // pred_region
      %70 = dma.done [#allocation3], 512
    $region25: #{tpu_custom_call.1} parent=1 // pred_fallthru
      _
    // Predicated region
    $region26: #{tpu_custom_call.1} parent=1 // pred_check
      _
    $region27: #{tpu_custom_call.1} parent=1 // pred_check_branch
      %72 = sbr.rel (0) target = $region29
    $region28: #{tpu_custom_call.1} parent=1 // pred_region
      %73 = dma.done [#allocation6], 32
    $region29: #{tpu_custom_call.1} parent=1 // pred_fallthru
      _
    // Predicated region
    $region30: #{tpu_custom_call.1} parent=1 // pred_check
      _
    $region31: #{tpu_custom_call.1} parent=1 // pred_check_branch
      %75 = sbr.rel (0) target = $region33
    $region32: #{tpu_custom_call.1} parent=1 // pred_region
      %76 = dma.done [#allocation6], 32
    $region33: #{tpu_custom_call.1} parent=1 // pred_fallthru
      _
    // Predicated region
    $region34: #{tpu_custom_call.1} parent=1 // pred_check
      _
    $region35: #{tpu_custom_call.1} parent=1 // pred_check_branch
      %78 = sbr.rel (0) target = $region37
    $region36: #{tpu_custom_call.1} parent=1 // pred_region
      %79 = dma.done [#allocation9], 2048
    $region37: #{tpu_custom_call.1} parent=1 // pred_fallthru
      _
    // Predicated region
    $region38: #{tpu_custom_call.1} parent=1 // pred_check
      _
    $region39: #{tpu_custom_call.1} parent=1 // pred_check_branch
      %81 = sbr.rel (0) target = $region41
    $region40: #{tpu_custom_call.1} parent=1 // pred_region
      %82 = dma.done [#allocation9], 16
    $region41: #{tpu_custom_call.1} parent=1 // pred_fallthru
      _
    %v84 = vld [vmem:[#allocation2] sm:$0xff]
    %v85 = vld [vmem:[#allocation2 + $0x8] sm:$0xff]
    %v86 = vld [vmem:[#allocation2 + $0x10] sm:$0xff]
    %v87 = vld [vmem:[#allocation2 + $0x18] sm:$0xff]
    %v88 = vadd.f32 %v84, %v85
    %89 = vadd.xlane.f32.xlu0 %v88
    %v90 = vpop.xlane.xlu0 %89
    %v91 = vadd.f32 %v86, %v87
    %92 = vadd.xlane.f32.xlu0 %v91
    %v93 = vpop.xlane.xlu0 %92
    %v94 = vrcp.pop 256.0
    %v95 = vmul.f32 %v90, %v94
    %v96 = vmul.f32 %v93, %v94
    %v97 = vmul.f32 %v84, %v84
    %v98 = vmul.f32 %v85, %v85
    %v99 = vmul.f32 %v86, %v86
    %v100 = vmul.f32 %v87, %v87
    %v101 = vadd.f32 %v97, %v98
    %102 = vadd.xlane.f32.xlu0 %v101
    %v103 = vpop.xlane.xlu0 %102
    %v104 = vadd.f32 %v99, %v100
    %105 = vadd.xlane.f32.xlu0 %v104
    %v106 = vpop.xlane.xlu0 %105
    %v107 = vmul.f32 %v103, %v94
    %v108 = vmul.f32 %v106, %v94
    %v109 = vmul.f32 %v95, %v95
    %v110 = vmul.f32 %v96, %v96
    %v111 = vsub.f32 %v107, %v109
    %v112 = vsub.f32 %v108, %v110
    %v113 = vadd.f32 %v111, 1e-05
    %v114 = vadd.f32 %v112, 1e-05
    %v115 = vrsqrt.pop %v113
    %v116 = vrsqrt.pop %v114
    %v117 = vsub.f32 %v84, %v95
    %v118 = vsub.f32 %v85, %v95
    %v119 = vsub.f32 %v86, %v96
    %v120 = vsub.f32 %v87, %v96
    %v121 = vmul.f32 %v117, %v115
    %v122 = vmul.f32 %v118, %v115
    %v123 = vmul.f32 %v119, %v116
    %v124 = vmul.f32 %v120, %v116
    %v125 = vld [vmem:[#allocation5] sm:$0x3]
    %v127 = vlaneseq
    %v128 = vshrl.u32 %v127, 7
    %v129 = vsub.s32 0, %v128
    %v130 = vrot.slane %v125, %v129
    %v131 = vlaneseq
    %v132 = vshrl.u32 %v131, 7
    %v133 = vsub.s32 1, %v132
    %v134 = vrot.slane %v125, %v133
    %v137 = vmul.f32 %v121, %v130
    %v138 = vmul.f32 %v122, %v134
    %v139 = vmul.f32 %v123, %v130
    %v140 = vmul.f32 %v124, %v134
    %v141 = vld [vmem:[#allocation7] sm:$0x3]
    %v143 = vlaneseq
    %v144 = vshrl.u32 %v143, 7
    %v145 = vsub.s32 0, %v144
    %v146 = vrot.slane %v141, %v145
    %v147 = vlaneseq
    %v148 = vshrl.u32 %v147, 7
    %v149 = vsub.s32 1, %v148
    %v150 = vrot.slane %v141, %v149
    %v153 = vadd.f32 %v137, %v146
    %v154 = vadd.f32 %v138, %v150
    %v155 = vadd.f32 %v139, %v146
    %v156 = vadd.f32 %v140, %v150
    %v157 = vpack.c.bf16 %v155, %v153
    %v158 = vpack.c.bf16 %v156, %v154
    %v159 = vld [vmem:[#allocation8] sm:$0xf]
    %v160 = vld [vmem:[#allocation8 + $0x4] sm:$0xf]
    %v161 = vld [vmem:[#allocation8 + $0x8] sm:$0xf]
    %v162 = vld [vmem:[#allocation8 + $0xc] sm:$0xf]
    %v163 = vld [vmem:[#allocation8 + $0x10] sm:$0xf]
    %v164 = vld [vmem:[#allocation8 + $0x14] sm:$0xf]
    %v165 = vld [vmem:[#allocation8 + $0x18] sm:$0xf]
    %v166 = vld [vmem:[#allocation8 + $0x1c] sm:$0xf]
    %v167 = vld [vmem:[#allocation8 + $0x20] sm:$0xf]
    %v168 = vld [vmem:[#allocation8 + $0x24] sm:$0xf]
    %v169 = vld [vmem:[#allocation8 + $0x28] sm:$0xf]
    %v170 = vld [vmem:[#allocation8 + $0x2c] sm:$0xf]
    %v171 = vld [vmem:[#allocation8 + $0x30] sm:$0xf]
    %v172 = vld [vmem:[#allocation8 + $0x34] sm:$0xf]
    %v173 = vld [vmem:[#allocation8 + $0x38] sm:$0xf]
    %v174 = vld [vmem:[#allocation8 + $0x3c] sm:$0xf]
    %v175 = vld [vmem:[#allocation8 + $0x40] sm:$0xf]
    %v176 = vld [vmem:[#allocation8 + $0x44] sm:$0xf]
    %v177 = vld [vmem:[#allocation8 + $0x48] sm:$0xf]
    %v178 = vld [vmem:[#allocation8 + $0x4c] sm:$0xf]
    %v179 = vld [vmem:[#allocation8 + $0x50] sm:$0xf]
    %v180 = vld [vmem:[#allocation8 + $0x54] sm:$0xf]
    %v181 = vld [vmem:[#allocation8 + $0x58] sm:$0xf]
    %v182 = vld [vmem:[#allocation8 + $0x5c] sm:$0xf]
    %v183 = vld [vmem:[#allocation8 + $0x60] sm:$0xf]
    %v184 = vld [vmem:[#allocation8 + $0x64] sm:$0xf]
    %v185 = vld [vmem:[#allocation8 + $0x68] sm:$0xf]
    %v186 = vld [vmem:[#allocation8 + $0x6c] sm:$0xf]
    %v187 = vld [vmem:[#allocation8 + $0x70] sm:$0xf]
    %v188 = vld [vmem:[#allocation8 + $0x74] sm:$0xf]
    %v189 = vld [vmem:[#allocation8 + $0x78] sm:$0xf]
    %v190 = vld [vmem:[#allocation8 + $0x7c] sm:$0xf]
    %v191 = vld [vmem:[#allocation10] sm:$0x1]
    %v193 = vlaneseq
    %v194 = vshrl.u32 %v193, 7
    %v195 = vsub.s32 0, %v194
    %v196 = vrot.slane %v191, %v195
    %v230 = vunpack.c.l.b16 %v159
    %v231 = vunpack.c.l.b16 %v160
    %v232 = vunpack.c.l.b16 %v161
    %v233 = vunpack.c.l.b16 %v162
    %v234 = vunpack.c.l.b16 %v163
    %v235 = vunpack.c.l.b16 %v164
    %v236 = vunpack.c.l.b16 %v165
    %v237 = vunpack.c.l.b16 %v166
    %v238 = vunpack.c.l.b16 %v167
    %v239 = vunpack.c.l.b16 %v168
    %v240 = vunpack.c.l.b16 %v169
    %v241 = vunpack.c.l.b16 %v170
    %v242 = vunpack.c.l.b16 %v171
    %v243 = vunpack.c.l.b16 %v172
    %v244 = vunpack.c.l.b16 %v173
    %v245 = vunpack.c.l.b16 %v174
    %v246 = vunpack.c.l.b16 %v175
    %v247 = vunpack.c.l.b16 %v176
    %v248 = vunpack.c.l.b16 %v177
    %v249 = vunpack.c.l.b16 %v178
    %v250 = vunpack.c.l.b16 %v179
    %v251 = vunpack.c.l.b16 %v180
    %v252 = vunpack.c.l.b16 %v181
    %v253 = vunpack.c.l.b16 %v182
    %v254 = vunpack.c.l.b16 %v183
    %v255 = vunpack.c.l.b16 %v184
    %v256 = vunpack.c.l.b16 %v185
    %v257 = vunpack.c.l.b16 %v186
    %v258 = vunpack.c.l.b16 %v187
    %v259 = vunpack.c.l.b16 %v188
    %v260 = vunpack.c.l.b16 %v189
    %v261 = vunpack.c.l.b16 %v190
    %v262 = vpack.c.b16 %v231, %v230
    %v263 = vpack.c.b16 %v233, %v232
    %v264 = vpack.c.b16 %v235, %v234
    %v265 = vpack.c.b16 %v237, %v236
    %v266 = vpack.c.b16 %v239, %v238
    %v267 = vpack.c.b16 %v241, %v240
    %v268 = vpack.c.b16 %v243, %v242
    %v269 = vpack.c.b16 %v245, %v244
    %v270 = vpack.c.b16 %v247, %v246
    %v271 = vpack.c.b16 %v249, %v248
    %v272 = vpack.c.b16 %v251, %v250
    %v273 = vpack.c.b16 %v253, %v252
    %v274 = vpack.c.b16 %v255, %v254
    %v275 = vpack.c.b16 %v257, %v256
    %v276 = vpack.c.b16 %v259, %v258
    %v277 = vpack.c.b16 %v261, %v260
    %294 = vmatprep.subr.bf16.mxu0 0
    %295 = vmatpush1.bf16.msra.mxu0 %v262
    %296 = vmatprep.subr.bf16.mxu0 0
    %297 = vmatpush1.bf16.msra.mxu0 %v263
    %298 = vmatprep.subr.bf16.mxu0 0
    %299 = vmatpush1.bf16.msra.mxu0 %v264
    %300 = vmatprep.subr.bf16.mxu0 0
    %301 = vmatpush1.bf16.msra.mxu0 %v265
    %302 = vmatprep.subr.bf16.mxu0 0
    %303 = vmatpush1.bf16.msra.mxu0 %v266
    %304 = vmatprep.subr.bf16.mxu0 0
    %305 = vmatpush1.bf16.msra.mxu0 %v267
    %306 = vmatprep.subr.bf16.mxu0 0
    %307 = vmatpush1.bf16.msra.mxu0 %v268
    %308 = vmatprep.subr.bf16.mxu0 0
    %309 = vmatpush1.bf16.msra.mxu0 %v269
    %310 = vmatprep.subr.bf16.mxu0 0
    %311 = vmatpush1.bf16.msra.mxu0 %v270
    %312 = vmatprep.subr.bf16.mxu0 0
    %313 = vmatpush1.bf16.msra.mxu0 %v271
    %314 = vmatprep.subr.bf16.mxu0 0
    %315 = vmatpush1.bf16.msra.mxu0 %v272
    %316 = vmatprep.subr.bf16.mxu0 0
    %317 = vmatpush1.bf16.msra.mxu0 %v273
    %318 = vmatprep.subr.bf16.mxu0 0
    %319 = vmatpush1.bf16.msra.mxu0 %v274
    %320 = vmatprep.subr.bf16.mxu0 0
    %321 = vmatpush1.bf16.msra.mxu0 %v275
    %322 = vmatprep.subr.bf16.mxu0 0
    %323 = vmatpush1.bf16.msra.mxu0 %v276
    %324 = vmatprep.subr.bf16.mxu0 0
    %325 = vmatpush1.bf16.msra.mxu0 %v277
    %326 = vmatprep.mubr.bf16.mxu0 %v158
    %327 = vmatmul.mubr.bf16.gmra.mrb[0].mxu0 %v157
    %v328 = vpop.f32.mrb[0].mxu0
    %v329 = vadd.f32 %v196, %v328
    %v330 = vpop.f32.mrb[0].mxu0
    %v331 = vpop.f32.mrb[0].mxu0
    %v332 = vadd.f32 %v196, %v331
    %v333 = vpop.f32.mrb[0].mxu0
    %334 = vdwg.mxu0
    %vm335 = vcmask 130048
    %336 = vst.msk [vmem:[#allocation11] sm:$0xff] %vm335, %v329
    %337 = vst.msk [vmem:[#allocation11 + $0x8] sm:$0xff] %vm335, %v332
    // Predicated region
    $region42: #{tpu_custom_call.1} parent=1 // pred_check
      _
    $region43: #{tpu_custom_call.1} parent=1 // pred_check_branch
      %339 = sbr.rel (0) target = $region45
    $region44: #{tpu_custom_call.1} parent=1 // pred_region
      %s341 = ssub.s32 256, 256
      %342 = vsyncadd [#allocation4], %s341
      %s343 = sshll.u32 [#allocation11], 4
      %s344 = int_to_ptr.vmem [resolvable:$true] %s343
      %349 = dma.vmem_to_hbm [thread:$0]  %s344, 256, %s5, [#allocation4], 128, 128, 8
    $region45: #{tpu_custom_call.1} parent=1 // pred_fallthru
      _
    // Predicated region
    $region46: #{tpu_custom_call.1} parent=1 // pred_check
      _
    $region47: #{tpu_custom_call.1} parent=1 // pred_check_branch
      %351 = sbr.rel (0) target = $region49
    $region48: #{tpu_custom_call.1} parent=1 // pred_region
      %352 = dma.done [#allocation4], 256
    $region49: #{tpu_custom_call.1} parent=1 // pred_fallthru
      _
    %353 = vsyncpa [#allocation3], 1
    %354 = vsyncpa [#allocation6], 1
    %355 = vsyncpa [#allocation9], 1
    %356 = vsyncpa [#allocation4], 1

</llo_original>
